<compile_context>
chip_gen: v5e
topology: v5e:2x2
jax: 0.10.0
libtpu: 0.0.40
codegen_flags: <defaults>
</compile_context>

<pallas_src>
import functools

import jax
import jax.numpy as jnp
from jax.experimental import pallas as pl
from jax.experimental.pallas import tpu as pltpu


def _round_up(x, m):
    return ((x + m - 1) // m) * m


def dqn_kernel(x_ref, w1_ref, b1_ref, w2_ref, b2_ref, w3_ref, b3_ref, o_ref):
    # fc1 + ReLU  (bf16 operands, f32 MXU accumulate, f32 epilogue on the VPU)
    h1 = jnp.dot(x_ref[...], w1_ref[...], preferred_element_type=jnp.float32)
    h1 = jnp.maximum(h1 + b1_ref[...], 0.0)
    # fc2 + ReLU
    h2 = jnp.dot(h1.astype(w2_ref.dtype), w2_ref[...],
                 preferred_element_type=jnp.float32)
    h2 = jnp.maximum(h2 + b2_ref[...], 0.0)
    # output head (no activation); lane-padded to 128 so the store is unmasked
    out = jnp.dot(h2.astype(w3_ref.dtype), w3_ref[...],
                  preferred_element_type=jnp.float32)
    o_ref[...] = (out + b3_ref[...]).astype(o_ref.dtype)


@functools.partial(jax.jit, static_argnames=("tile_b",))
def dqn_forward(x, w1, b1, w2, b2, w3, b3, *, tile_b=1024):
    """Fused DQN forward.  x: (B, in_dim) f32.  Returns (B, n_actions) f32."""
    B, in_dim = x.shape
    fc1 = w1.shape[1]
    fc2 = w2.shape[1]
    n_actions = w3.shape[1]
    n_pad = _round_up(max(n_actions, 128), 128)     # lane-dense output slab

    # --- batch tiling: pad rows to a sublane/tile multiple, one tile when small ---
    b_pad = _round_up(max(B, 8), 8)
    if b_pad <= tile_b:
        tb = b_pad
    else:
        tb = tile_b
        b_pad = _round_up(B, tb)
    if b_pad != B:
        x = jnp.pad(x, ((0, b_pad - B), (0, 0)))

    # --- pad the output head to 128 lanes (zero columns are sliced off afterwards) ---
    w3p = jnp.pad(w3, ((0, 0), (0, n_pad - n_actions)))
    b3p = jnp.pad(b3, ((0, 0), (0, n_pad - n_actions)))

    # --- bf16 matmul operands, f32 biases / epilogue ---
    xc = x.astype(jnp.bfloat16)
    w1c = w1.astype(jnp.bfloat16)
    w2c = w2.astype(jnp.bfloat16)
    w3c = w3p.astype(jnp.bfloat16)
    b1f = b1.astype(jnp.float32)
    b2f = b2.astype(jnp.float32)
    b3f = b3p.astype(jnp.float32)

    grid = (b_pad // tb,)

    flops = 2 * b_pad * (in_dim * fc1 + fc1 * fc2 + fc2 * n_pad)
    bytes_accessed = (xc.size * 2 + w1c.size * 2 + w2c.size * 2 + w3c.size * 2
                      + b1f.size * 4 + b2f.size * 4 + b3f.size * 4
                      + b_pad * n_pad * 4)

    out_pad = pl.pallas_call(
        dqn_kernel,
        out_shape=jax.ShapeDtypeStruct((b_pad, n_pad), jnp.float32),
        grid=grid,
        in_specs=[
            pl.BlockSpec((tb, in_dim), lambda i: (i, 0)),   # x tile, pipelined per step
            pl.BlockSpec((in_dim, fc1), lambda i: (0, 0)),  # weights/biases VMEM-resident
            pl.BlockSpec((1, fc1), lambda i: (0, 0)),
            pl.BlockSpec((fc1, fc2), lambda i: (0, 0)),
            pl.BlockSpec((1, fc2), lambda i: (0, 0)),
            pl.BlockSpec((fc2, n_pad), lambda i: (0, 0)),
            pl.BlockSpec((1, n_pad), lambda i: (0, 0)),
        ],
        out_specs=pl.BlockSpec((tb, n_pad), lambda i: (i, 0)),
        compiler_params=pltpu.CompilerParams(
            dimension_semantics=("parallel",),
        ),
        cost_estimate=pl.CostEstimate(
            flops=flops, transcendentals=0, bytes_accessed=bytes_accessed),
    )(xc, w1c, b1f, w2c, b2f, w3c, b3f)

    return out_pad[:B, :n_actions]


def make_params(key, in_dim, fc1, fc2, n_actions):
    """Deterministic init mimicking nn.Linear's uniform(-1/sqrt(fan_in), 1/sqrt(fan_in))."""
    ks = jax.random.split(key, 6)

    def linear(kw, kb, fan_in, fan_out):
        bound = 1.0 / jnp.sqrt(jnp.float32(fan_in))
        w = jax.random.uniform(kw, (fan_in, fan_out), jnp.float32, -bound, bound)
        b = jax.random.uniform(kb, (1, fan_out), jnp.float32, -bound, bound)
        return w, b

    w1, b1 = linear(ks[0], ks[1], in_dim, fc1)
    w2, b2 = linear(ks[2], ks[3], fc1, fc2)
    w3, b3 = linear(ks[4], ks[5], fc2, n_actions)
    return w1, b1, w2, b2, w3, b3


def _reference(x, w1, b1, w2, b2, w3, b3):
    """Pure-JAX reference with the SAME bf16 operand casts / f32 accumulation."""
    bf = jnp.bfloat16
    h1 = jnp.dot(x.astype(bf), w1.astype(bf), preferred_element_type=jnp.float32)
    h1 = jnp.maximum(h1 + b1, 0.0)
    h2 = jnp.dot(h1.astype(bf), w2.astype(bf), preferred_element_type=jnp.float32)
    h2 = jnp.maximum(h2 + b2, 0.0)
    out = jnp.dot(h2.astype(bf), w3.astype(bf), preferred_element_type=jnp.float32)
    return out + b3


if __name__ == "__main__":
    # Small shapes consistent with DeepQNetwork(lr, input_dims=(32,), n_actions=8, fc1=64, fc2=32)
    batch, in_dim, fc1, fc2, n_actions = 8, 32, 64, 32, 8

    key = jax.random.PRNGKey(0)
    k_x, k_p, k_x2 = jax.random.split(key, 3)
    x = jax.random.normal(k_x, (batch, in_dim), jnp.float32)
    w1, b1, w2, b2, w3, b3 = make_params(k_p, in_dim, fc1, fc2, n_actions)

    out = dqn_forward(x, w1, b1, w2, b2, w3, b3)
    out = jax.block_until_ready(out)

    ref = _reference(x, w1, b1, w2, b2, w3, b3)
    assert out.shape == (batch, n_actions)
    assert jnp.allclose(out, ref, atol=2e-3, rtol=1e-3), \
        f"max abs err {jnp.max(jnp.abs(out - ref))}"

    # Also check against a pure-f32 reference (PyTorch-equivalent numerics), loose tol for bf16.
    h = jnp.maximum(x @ w1 + b1, 0.0)
    h = jnp.maximum(h @ w2 + b2, 0.0)
    ref_f32 = h @ w3 + b3
    assert jnp.allclose(out, ref_f32, atol=3e-2, rtol=3e-2)

    # Exercise the batch-padding path (non-multiple-of-8 batch).
    x2 = jax.random.normal(k_x2, (5, in_dim), jnp.float32)
    out2 = jax.block_until_ready(dqn_forward(x2, w1, b1, w2, b2, w3, b3))
    ref2 = _reference(x2, w1, b1, w2, b2, w3, b3)
    assert out2.shape == (5, n_actions)
    assert jnp.allclose(out2, ref2, atol=2e-3, rtol=1e-3)

    print("KERNEL_OK")
</pallas_src>

<mosaic_0001>
module attributes {stable_mosaic.version = 11 : i64} {
  func.func @dqn_kernel(%arg0: i32, %arg1: memref<8x32xbf16, #tpu.memory_space<vmem>>, %arg2: memref<32x64xbf16, #tpu.memory_space<vmem>>, %arg3: memref<1x64xf32, #tpu.memory_space<vmem>>, %arg4: memref<64x32xbf16, #tpu.memory_space<vmem>>, %arg5: memref<1x32xf32, #tpu.memory_space<vmem>>, %arg6: memref<32x128xbf16, #tpu.memory_space<vmem>>, %arg7: memref<1x128xf32, #tpu.memory_space<vmem>>, %arg8: memref<8x128xf32, #tpu.memory_space<vmem>>) attributes {dimension_semantics = [#tpu.dimension_semantics<parallel>], iteration_bounds = array<i64: 1>, scalar_prefetch = 0 : i64, scratch_operands = 0 : i64, tpu.core_type = #tpu.core_type<tc>, window_params = [{transform_indices = @transform_0, window_bounds = array<i64: 8, 32>}, {pipeline_mode = #tpu.pipeline_mode<synchronous>, transform_indices = @transform_1, window_bounds = array<i64: 32, 64>}, {pipeline_mode = #tpu.pipeline_mode<synchronous>, transform_indices = @transform_2, window_bounds = array<i64: 1, 64>}, {pipeline_mode = #tpu.pipeline_mode<synchronous>, transform_indices = @transform_3, window_bounds = array<i64: 64, 32>}, {pipeline_mode = #tpu.pipeline_mode<synchronous>, transform_indices = @transform_4, window_bounds = array<i64: 1, 32>}, {pipeline_mode = #tpu.pipeline_mode<synchronous>, transform_indices = @transform_5, window_bounds = array<i64: 32, 128>}, {pipeline_mode = #tpu.pipeline_mode<synchronous>, transform_indices = @transform_6, window_bounds = array<i64: 1, 128>}, {transform_indices = @transform_7, window_bounds = array<i64: 8, 128>}]} {
    %c0 = arith.constant 0 : index
    %c0_0 = arith.constant 0 : index
    %0 = vector.load %arg1[%c0, %c0_0] : memref<8x32xbf16, #tpu.memory_space<vmem>>, vector<8x32xbf16>
    %c0_1 = arith.constant 0 : index
    %c0_2 = arith.constant 0 : index
    %1 = vector.load %arg2[%c0_1, %c0_2] : memref<32x64xbf16, #tpu.memory_space<vmem>>, vector<32x64xbf16>
    %cst = arith.constant dense<0.000000e+00> : vector<8x64xf32>
    %2 = tpu.matmul %0, %1, %cst {dimension_numbers = #tpu.dot_dimension_numbers<[1], [0], [0], [1], [0, 0, 1, 1], [], []>} : vector<8x32xbf16>, vector<32x64xbf16>, vector<8x64xf32> -> vector<8x64xf32>
    %c0_3 = arith.constant 0 : index
    %c0_4 = arith.constant 0 : index
    %3 = vector.load %arg3[%c0_3, %c0_4] : memref<1x64xf32, #tpu.memory_space<vmem>>, vector<1x64xf32>
    %4 = vector.broadcast %3 : vector<1x64xf32> to vector<8x64xf32>
    %5 = arith.addf %2, %4 : vector<8x64xf32>
    %cst_5 = arith.constant 0.000000e+00 : f32
    %6 = vector.broadcast %cst_5 : f32 to vector<8x64xf32>
    %7 = arith.maximumf %5, %6 : vector<8x64xf32>
    %8 = arith.truncf %7 : vector<8x64xf32> to vector<8x64xbf16>
    %c0_6 = arith.constant 0 : index
    %c0_7 = arith.constant 0 : index
    %9 = vector.load %arg4[%c0_6, %c0_7] : memref<64x32xbf16, #tpu.memory_space<vmem>>, vector<64x32xbf16>
    %cst_8 = arith.constant dense<0.000000e+00> : vector<8x32xf32>
    %10 = tpu.matmul %8, %9, %cst_8 {dimension_numbers = #tpu.dot_dimension_numbers<[1], [0], [0], [1], [0, 0, 1, 1], [], []>} : vector<8x64xbf16>, vector<64x32xbf16>, vector<8x32xf32> -> vector<8x32xf32>
    %c0_9 = arith.constant 0 : index
    %c0_10 = arith.constant 0 : index
    %11 = vector.load %arg5[%c0_9, %c0_10] : memref<1x32xf32, #tpu.memory_space<vmem>>, vector<1x32xf32>
    %12 = vector.broadcast %11 : vector<1x32xf32> to vector<8x32xf32>
    %13 = arith.addf %10, %12 : vector<8x32xf32>
    %cst_11 = arith.constant 0.000000e+00 : f32
    %14 = vector.broadcast %cst_11 : f32 to vector<8x32xf32>
    %15 = arith.maximumf %13, %14 : vector<8x32xf32>
    %16 = arith.truncf %15 : vector<8x32xf32> to vector<8x32xbf16>
    %c0_12 = arith.constant 0 : index
    %c0_13 = arith.constant 0 : index
    %17 = vector.load %arg6[%c0_12, %c0_13] : memref<32x128xbf16, #tpu.memory_space<vmem>>, vector<32x128xbf16>
    %cst_14 = arith.constant dense<0.000000e+00> : vector<8x128xf32>
    %18 = tpu.matmul %16, %17, %cst_14 {dimension_numbers = #tpu.dot_dimension_numbers<[1], [0], [0], [1], [0, 0, 1, 1], [], []>} : vector<8x32xbf16>, vector<32x128xbf16>, vector<8x128xf32> -> vector<8x128xf32>
    %c0_15 = arith.constant 0 : index
    %c0_16 = arith.constant 0 : index
    %19 = vector.load %arg7[%c0_15, %c0_16] : memref<1x128xf32, #tpu.memory_space<vmem>>, vector<1x128xf32>
    %20 = vector.broadcast %19 : vector<1x128xf32> to vector<8x128xf32>
    %21 = arith.addf %18, %20 : vector<8x128xf32>
    %c0_17 = arith.constant 0 : index
    %c0_18 = arith.constant 0 : index
    %22 = vector.load %arg8[%c0_17, %c0_18] : memref<8x128xf32, #tpu.memory_space<vmem>>, vector<8x128xf32>
    tpu.vector_store %arg8[%c0_17, %c0_18], %21 {strides = array<i32>} : memref<8x128xf32, #tpu.memory_space<vmem>>, vector<8x128xf32>,
    return
  }
  func.func @transform_0(%arg0: i32) -> (i32, i32) {
    %c0_i32 = arith.constant 0 : i32
    %c0_i32_0 = arith.constant 0 : i32
    return %arg0, %c0_i32 : i32, i32
  }
  func.func @transform_1(%arg0: i32) -> (i32, i32) {
    %c0_i32 = arith.constant 0 : i32
    %c0_i32_0 = arith.constant 0 : i32
    %c0_i32_1 = arith.constant 0 : i32
    return %c0_i32, %c0_i32_0 : i32, i32
  }
  func.func @transform_2(%arg0: i32) -> (i32, i32) {
    %c0_i32 = arith.constant 0 : i32
    %c0_i32_0 = arith.constant 0 : i32
    %c0_i32_1 = arith.constant 0 : i32
    return %c0_i32, %c0_i32_0 : i32, i32
  }
  func.func @transform_3(%arg0: i32) -> (i32, i32) {
    %c0_i32 = arith.constant 0 : i32
    %c0_i32_0 = arith.constant 0 : i32
    %c0_i32_1 = arith.constant 0 : i32
    return %c0_i32, %c0_i32_0 : i32, i32
  }
  func.func @transform_4(%arg0: i32) -> (i32, i32) {
    %c0_i32 = arith.constant 0 : i32
    %c0_i32_0 = arith.constant 0 : i32
    %c0_i32_1 = arith.constant 0 : i32
    return %c0_i32, %c0_i32_0 : i32, i32
  }
  func.func @transform_5(%arg0: i32) -> (i32, i32) {
    %c0_i32 = arith.constant 0 : i32
    %c0_i32_0 = arith.constant 0 : i32
    %c0_i32_1 = arith.constant 0 : i32
    return %c0_i32, %c0_i32_0 : i32, i32
  }
  func.func @transform_6(%arg0: i32) -> (i32, i32) {
    %c0_i32 = arith.constant 0 : i32
    %c0_i32_0 = arith.constant 0 : i32
    %c0_i32_1 = arith.constant 0 : i32
    return %c0_i32, %c0_i32_0 : i32, i32
  }
  func.func @transform_7(%arg0: i32) -> (i32, i32) {
    %c0_i32 = arith.constant 0 : i32
    %c0_i32_0 = arith.constant 0 : i32
    return %arg0, %c0_i32 : i32, i32
  }
}

</mosaic_0001>

<llo_original>
// kernel: dqn_forward.1
$region0: #{dqn_forward.1}
  #allocation0 [shape = 'u32[]', space=smem, size = 0x4, offset = 0x4, fixed_abs, tag = 'smem constant byte address 0x4 - core index']
  #allocation1 [shape = 'u32[72,128]{1,0:T(1,128)}', space=vmem, size = 0x9000, scoped, tag = 'internal scratch']
  %s0 = inlined_call_operand.vmem [shape: bf16[8,32], index: 0, kind: input, shape index: {}]
  %s1 = inlined_call_operand.vmem [shape: bf16[32,64], index: 1, kind: input, shape index: {}]
  %s2 = inlined_call_operand.vmem [shape: f32[1,64], index: 2, kind: input, shape index: {}]
  %s3 = inlined_call_operand.vmem [shape: bf16[64,32], index: 3, kind: input, shape index: {}]
  %s4 = inlined_call_operand.vmem [shape: f32[1,32], index: 4, kind: input, shape index: {}]
  %s5 = inlined_call_operand.vmem [shape: bf16[32,128], index: 5, kind: input, shape index: {}]
  %s6 = inlined_call_operand.vmem [shape: f32[1,128], index: 6, kind: input, shape index: {}]
  %s7 = inlined_call_operand.hbm [shape: f32[8,128], index: 7, kind: output, shape index: {}]
  %s8 = sld [smem:[#allocation0]]
  $region38: #{dqn_forward.1} parent=0
    _
  %s10 = ssub.s32 1, %s8
  %s11 = scalar_select 0, %s10, %s8
  $region1: #{dqn_forward.1} parent=0
    #allocation2 [shape = 'u8[4096]{0}', space=vmem, size = 0x1000, scoped, tag = 'output window, operand 0, single buffered']
    #allocation3 [shape = 's32[1]{0}', space=sflag, size = 0x4, scoped, tag = 'scoped memory for dqn_forward.1']
    %12 = vsyncpa [#allocation3], 0
    // Predicated region
    $region2: #{dqn_forward.1} parent=1 // pred_check
      _
    $region3: #{dqn_forward.1} parent=1 // pred_check_branch
      %14 = sbr.rel (0) target = $region5
    $region4: #{dqn_forward.1} parent=1 // pred_region
      _
    $region5: #{dqn_forward.1} parent=1 // pred_fallthru
      _
    // Predicated region
    $region6: #{dqn_forward.1} parent=1 // pred_check
      _
    $region7: #{dqn_forward.1} parent=1 // pred_check_branch
      %16 = sbr.rel (0) target = $region9
    $region8: #{dqn_forward.1} parent=1 // pred_region
      _
    $region9: #{dqn_forward.1} parent=1 // pred_fallthru
      _
    // Predicated region
    $region10: #{dqn_forward.1} parent=1 // pred_check
      _
    $region11: #{dqn_forward.1} parent=1 // pred_check_branch
      %18 = sbr.rel (0) target = $region13
    $region12: #{dqn_forward.1} parent=1 // pred_region
      _
    $region13: #{dqn_forward.1} parent=1 // pred_fallthru
      _
    // Predicated region
    $region14: #{dqn_forward.1} parent=1 // pred_check
      _
    $region15: #{dqn_forward.1} parent=1 // pred_check_branch
      %20 = sbr.rel (0) target = $region17
    $region16: #{dqn_forward.1} parent=1 // pred_region
      _
    $region17: #{dqn_forward.1} parent=1 // pred_fallthru
      _
    // Predicated region
    $region18: #{dqn_forward.1} parent=1 // pred_check
      _
    $region19: #{dqn_forward.1} parent=1 // pred_check_branch
      %22 = sbr.rel (0) target = $region21
    $region20: #{dqn_forward.1} parent=1 // pred_region
      _
    $region21: #{dqn_forward.1} parent=1 // pred_fallthru
      _
    // Predicated region
    $region22: #{dqn_forward.1} parent=1 // pred_check
      _
    $region23: #{dqn_forward.1} parent=1 // pred_check_branch
      %24 = sbr.rel (0) target = $region25
    $region24: #{dqn_forward.1} parent=1 // pred_region
      _
    $region25: #{dqn_forward.1} parent=1 // pred_fallthru
      _
    // Predicated region
    $region26: #{dqn_forward.1} parent=1 // pred_check
      _
    $region27: #{dqn_forward.1} parent=1 // pred_check_branch
      %26 = sbr.rel (0) target = $region29
    $region28: #{dqn_forward.1} parent=1 // pred_region
      _
    $region29: #{dqn_forward.1} parent=1 // pred_fallthru
      _
    %v28 = vld [vmem:[%s0] sm:$0xf]
    %v29 = vld [vmem:[%s1] sm:$0xf]
    %v30 = vld [vmem:[%s1 + $0x4] sm:$0xf]
    %v31 = vld [vmem:[%s1 + $0x8] sm:$0xf]
    %v32 = vld [vmem:[%s1 + $0xc] sm:$0xf]
    %v33 = vld [vmem:[%s2] sm:$0x1]
    %v35 = vperm.slane %v33, 0
    %v41 = vunpack.c.l.b16 %v29
    %v42 = vunpack.c.l.b16 %v30
    %v43 = vunpack.c.l.b16 %v31
    %v44 = vunpack.c.l.b16 %v32
    %v45 = vpack.c.b16 %v42, %v41
    %v46 = vpack.c.b16 %v44, %v43
    %vm49 = vcmask 261120
    %v51 = vsel %vm49, %v28, 0
    %53 = vmatpush.bf16.msra.mxu0 0
    %54 = vmatpush.bf16.msra.mxu0 0
    %55 = vmatpush.bf16.msra.mxu0 0
    %56 = vmatpush.bf16.msra.mxu0 0
    %57 = vmatpush.bf16.msra.mxu0 0
    %58 = vmatpush.bf16.msra.mxu0 0
    %59 = vmatpush.bf16.msra.mxu0 %v46
    %60 = vmatpush.bf16.msra.mxu0 %v45
    %61 = vmatmul.bf16.gmra.mxu0 %v51
    %v62 = vpop.f32.mrf.mxu0
    %v63 = vadd.f32 %v35, %v62
    %v64 = vpop.f32.mrf.mxu0
    %65 = vdwg.mxu0
    %v66 = vmax.f32 %v63, 0.0
    %v67 = vpack.c.bf16 %v66, %v66
    %v68 = vld [vmem:[%s3] sm:$0xf]
    %v69 = vld [vmem:[%s3 + $0x4] sm:$0xf]
    %v70 = vld [vmem:[%s3 + $0x8] sm:$0xf]
    %v71 = vld [vmem:[%s3 + $0xc] sm:$0xf]
    %v72 = vld [vmem:[%s3 + $0x10] sm:$0xf]
    %v73 = vld [vmem:[%s3 + $0x14] sm:$0xf]
    %v74 = vld [vmem:[%s3 + $0x18] sm:$0xf]
    %v75 = vld [vmem:[%s3 + $0x1c] sm:$0xf]
    %v76 = vld [vmem:[%s4] sm:$0x1]
    %v78 = vperm.slane %v76, 0
    %v88 = vunpack.c.l.b16 %v68
    %v89 = vunpack.c.l.b16 %v69
    %v90 = vunpack.c.l.b16 %v70
    %v91 = vunpack.c.l.b16 %v71
    %v92 = vunpack.c.l.b16 %v72
    %v93 = vunpack.c.l.b16 %v73
    %v94 = vunpack.c.l.b16 %v74
    %v95 = vunpack.c.l.b16 %v75
    %v96 = vpack.c.b16 %v89, %v88
    %v97 = vpack.c.b16 %v91, %v90
    %v98 = vpack.c.b16 %v93, %v92
    %v99 = vpack.c.b16 %v95, %v94
    %vm104 = vcmask 523264
    %v106 = vsel %vm104, %v67, 0
    %108 = vmatpush.bf16.msra.mxu0 0
    %109 = vmatpush.bf16.msra.mxu0 0
    %110 = vmatpush.bf16.msra.mxu0 0
    %111 = vmatpush.bf16.msra.mxu0 0
    %112 = vmatpush.bf16.msra.mxu0 %v99
    %113 = vmatpush.bf16.msra.mxu0 %v98
    %114 = vmatpush.bf16.msra.mxu0 %v97
    %115 = vmatpush.bf16.msra.mxu0 %v96
    %116 = vmatmul.bf16.gmra.mxu0 %v106
    %v117 = vpop.f32.mrf.mxu0
    %v118 = vadd.f32 %v78, %v117
    %v119 = vpop.f32.mrf.mxu0
    %120 = vdwg.mxu0
    %v121 = vmax.f32 %v118, 0.0
    %v122 = vpack.c.bf16 %v121, %v121
    %v123 = vld [vmem:[%s5] sm:$0xf]
    %v124 = vld [vmem:[%s5 + $0x4] sm:$0xf]
    %v125 = vld [vmem:[%s5 + $0x8] sm:$0xf]
    %v126 = vld [vmem:[%s5 + $0xc] sm:$0xf]
    %v127 = vld [vmem:[%s6] sm:$0x1]
    %v129 = vperm.slane %v127, 0
    %v135 = vunpack.c.l.b16 %v123
    %v136 = vunpack.c.l.b16 %v124
    %v137 = vunpack.c.l.b16 %v125
    %v138 = vunpack.c.l.b16 %v126
    %v139 = vpack.c.b16 %v136, %v135
    %v140 = vpack.c.b16 %v138, %v137
    %v144 = vsel %vm49, %v122, 0
    %146 = vmatpush.bf16.msra.mxu0 0
    %147 = vmatpush.bf16.msra.mxu0 0
    %148 = vmatpush.bf16.msra.mxu0 0
    %149 = vmatpush.bf16.msra.mxu0 0
    %150 = vmatpush.bf16.msra.mxu0 0
    %151 = vmatpush.bf16.msra.mxu0 0
    %152 = vmatpush.bf16.msra.mxu0 %v140
    %153 = vmatpush.bf16.msra.mxu0 %v139
    %154 = vmatmul.bf16.gmra.mxu0 %v144
    %v155 = vpop.f32.mrf.mxu0
    %v156 = vadd.f32 %v129, %v155
    %v157 = vpop.f32.mrf.mxu0
    %158 = vdwg.mxu0
    %159 = vst [vmem:[#allocation2] sm:$0xff] %v156
    // Predicated region
    $region30: #{dqn_forward.1} parent=1 // pred_check
      _
    $region31: #{dqn_forward.1} parent=1 // pred_check_branch
      %161 = sbr.rel (0) target = $region33
    $region32: #{dqn_forward.1} parent=1 // pred_region
      %163 = vsyncadd [#allocation3], 0
      %s165 = sshll.u32 [#allocation2], 4
      %s166 = int_to_ptr.vmem [resolvable:$true] %s165
      %s167 = sshll.u32 %s7, 4
      %s168 = int_to_ptr.hbm [resolvable:$true] %s167
      %170 = dma.vmem_to_hbm [thread:$0]  %s166, 128, %s168, [#allocation3]
    $region33: #{dqn_forward.1} parent=1 // pred_fallthru
      _
    // Predicated region
    $region34: #{dqn_forward.1} parent=1 // pred_check
      _
    $region35: #{dqn_forward.1} parent=1 // pred_check_branch
      %172 = sbr.rel (0) target = $region37
    $region36: #{dqn_forward.1} parent=1 // pred_region
      %174 = dma.done [#allocation3], 128
    $region37: #{dqn_forward.1} parent=1 // pred_fallthru
      _
    %175 = vsyncpa [#allocation3], 1

</llo_original>
